<compile_context>
chip_gen: v6e
topology: v6e:2x2x1
jax: 0.10.0
libtpu: 0.0.40
codegen_flags: <defaults>
</compile_context>

<pallas_src>
import jax
import jax.numpy as jnp
from jax.experimental import pallas as pl
from jax.experimental.pallas import tpu as pltpu


def _make_attention_block_kernel(cast_dot_to_bf16):
    def kernel(x_ref, w_ref, b_ref, o_ref):
        # x_ref: (TB, C, TL) slab of the (B, C, L) input
        # w_ref: (C, C)  conv weight, layout (out_channels, in_channels)
        # b_ref: (C, 1)  conv bias (f32, sublane-broadcast over L)
        w = w_ref[...]
        b = b_ref[...]
        tb = x_ref.shape[0]
        for bb in range(tb):                      # static unroll over the small batch tile
            x = x_ref[bb]                         # (C, TL)
            xd = x.astype(jnp.bfloat16) if cast_dot_to_bf16 else x
            # Conv1d(k=1) in NCL layout: y[o, l] = sum_c W[o, c] * x[c, l] + b[o]
            y = jnp.dot(w, xd, preferred_element_type=jnp.float32) + b   # (C, TL) f32
            attn = jax.nn.sigmoid(y)              # EUP exp/recip path, no inf intermediate
            o_ref[bb] = (x * attn).astype(o_ref.dtype)

    return kernel


def _vmem_capacity_bytes():
    try:
        return int(pltpu.get_tpu_info().vmem_capacity_bytes)
    except Exception:
        return 64 * 1024 * 1024   # conservative default (v7x per-TensorCore)


def _choose_tiles(B, C, L, x_itemsize, w_itemsize):
    """Pick (TB, TL, vmem_limit_bytes) from a generation-aware VMEM budget."""
    vmem_cap = _vmem_capacity_bytes()
    usable = (vmem_cap * 3) // 4                  # leave headroom for compiler scratch

    cpad = -(-C // 8) * 8
    weight_bytes = C * C * w_itemsize + cpad * 128 * w_itemsize   # resident weight + padded bias

    # Four pipelined data buffers: 2x x-tile (double-buffered) + 2x out-tile.
    remaining = max(usable - weight_bytes, 1 << 20)
    per_buf_cap = 6 * 1024 * 1024 if vmem_cap <= 64 * 1024 * 1024 else 8 * 1024 * 1024
    per_buf = min(remaining // 4, per_buf_cap)

    row_bytes = C * L * x_itemsize                # one full-length batch row
    if row_bytes <= per_buf:
        tl = L
        tb = max(1, min(B, per_buf // max(row_bytes, 1)))
    else:
        tb = 1
        tl = per_buf // max(C * x_itemsize, 1)
        tl = max(128, (tl // 128) * 128)          # lane-aligned
        if tl >= L:
            tl = L

    # v7x megacore: avoid a degenerate (1, 1) grid when there is real work to split.
    if tb >= B and tl >= L and B * row_bytes > (2 << 20):
        if B >= 2:
            tb = -(-B // 2)
        elif L >= 256:
            half = max(128, ((L // 2) // 128) * 128)
            if half < L:
                tl = half

    # Derived scoped-VMEM limit: pipelined tiles + (conservatively double-buffered)
    # weight/bias + headroom, clamped to physical capacity.
    tile_bytes = tb * C * tl * x_itemsize
    limit = 4 * tile_bytes + 2 * weight_bytes + (4 << 20)
    limit = max(limit, 16 << 20)
    limit = min(limit, (vmem_cap * 9) // 10)
    return tb, tl, int(limit)


def attention_block(x_ncl, weight, bias):
    """x_ncl: (B, C, L); weight: (C, C) as (out_ch, in_ch); bias: (C,). Returns (B, C, L)."""
    B, C, L = x_ncl.shape
    x_itemsize = jnp.dtype(x_ncl.dtype).itemsize

    # MXU is bf16-native: once C is large enough that the matmul (and the resident
    # weight's VMEM) matters, run the dot in bf16 with f32 accumulation.
    cast_dot_to_bf16 = (x_ncl.dtype == jnp.float32) and (C >= 512)
    w = weight.astype(jnp.bfloat16) if cast_dot_to_bf16 else weight
    bias2d = bias.astype(jnp.float32).reshape(C, 1)
    w_itemsize = jnp.dtype(w.dtype).itemsize

    TB, TL, vmem_limit = _choose_tiles(B, C, L, x_itemsize, w_itemsize)
    grid = (pl.cdiv(B, TB), pl.cdiv(L, TL))

    kernel = _make_attention_block_kernel(cast_dot_to_bf16)
    out_shape = jax.ShapeDtypeStruct((B, C, L), x_ncl.dtype)

    def run(single_buffer_params):
        # Constant-index weight/bias: fetched once; request a single VMEM buffer for them.
        wkw = dict(pipeline_mode=pl.Buffered(1)) if single_buffer_params else {}
        in_specs = [
            pl.BlockSpec((TB, C, TL), lambda b, l: (b, 0, l)),   # (batch, L-tile) slab
            pl.BlockSpec((C, C), lambda b, l: (0, 0), **wkw),    # weight resident
            pl.BlockSpec((C, 1), lambda b, l: (0, 0), **wkw),    # bias resident
        ]
        out_specs = pl.BlockSpec((TB, C, TL), lambda b, l: (b, 0, l))
        return pl.pallas_call(
            kernel,
            out_shape=out_shape,
            grid=grid,
            in_specs=in_specs,
            out_specs=out_specs,
            compiler_params=pltpu.CompilerParams(
                dimension_semantics=("parallel", "parallel"),
                vmem_limit_bytes=vmem_limit,
            ),
        )(x_ncl, w, bias2d)

    # TODO(synk): for very large C (bf16 weight alone threatening v7x's 64 MiB/TC), add an
    # output-channel grid axis (W tiled (TCo, C), out tiled (TB, TCo, TL)) instead of
    # shrinking TL below the lane-dense sweet spot.
    try:
        return run(single_buffer_params=True)
    except Exception:
        # Fallback if this jaxlib rejects pipeline_mode on the grid-pipelined path.
        return run(single_buffer_params=False)


def attention_block_ref(x_ncl, weight, bias):
    # pure-JAX reference of the PyTorch forward
    # Conv1d(k=1): y[b,o,l] = sum_c W[o,c] * x[b,c,l] + bias[o]
    y = jnp.einsum("oc,bcl->bol", weight, x_ncl) + bias[None, :, None]
    return x_ncl * jax.nn.sigmoid(y)


if __name__ == "__main__":
    B, C, L = 2, 4, 16

    key = jax.random.PRNGKey(0)
    kx, kw, kb = jax.random.split(key, 3)

    # Deterministic parameter init mimicking nn.Conv1d default (uniform +/- 1/sqrt(fan_in))
    fan_in = C * 1
    bound = 1.0 / (fan_in ** 0.5)
    weight = jax.random.uniform(kw, (C, C), jnp.float32, -bound, bound)
    bias = jax.random.uniform(kb, (C,), jnp.float32, -bound, bound)

    x = jax.random.normal(kx, (B, C, L), jnp.float32)

    out = attention_block(x, weight, bias)
    out = jax.block_until_ready(out)

    ref = attention_block_ref(x, weight, bias)
    assert out.shape == (B, C, L)
    assert jnp.allclose(out, ref, atol=1e-5, rtol=1e-5)

    print("KERNEL_OK")
</pallas_src>

<mosaic_0001>
module attributes {stable_mosaic.version = 11 : i64} {
  func.func @kernel(%arg0: i32, %arg1: i32, %arg2: memref<2x4x16xf32, #tpu.memory_space<vmem>>, %arg3: memref<4x4xf32, #tpu.memory_space<vmem>>, %arg4: memref<4x1xf32, #tpu.memory_space<vmem>>, %arg5: memref<2x4x16xf32, #tpu.memory_space<vmem>>) attributes {dimension_semantics = [#tpu.dimension_semantics<parallel>, #tpu.dimension_semantics<parallel>], iteration_bounds = array<i64: 1, 1>, scalar_prefetch = 0 : i64, scratch_operands = 0 : i64, tpu.core_type = #tpu.core_type<tc>, window_params = [{transform_indices = @transform_0, window_bounds = array<i64: 2, 4, 16>}, {pipeline_mode = #tpu.pipeline_mode<synchronous>, transform_indices = @transform_1, window_bounds = array<i64: 4, 4>}, {pipeline_mode = #tpu.pipeline_mode<synchronous>, transform_indices = @transform_2, window_bounds = array<i64: 4, 1>}, {transform_indices = @transform_3, window_bounds = array<i64: 2, 4, 16>}]} {
    %c0 = arith.constant 0 : index
    %c0_0 = arith.constant 0 : index
    %0 = vector.load %arg3[%c0, %c0_0] : memref<4x4xf32, #tpu.memory_space<vmem>>, vector<4x4xf32>
    %c0_1 = arith.constant 0 : index
    %c0_2 = arith.constant 0 : index
    %1 = vector.load %arg4[%c0_1, %c0_2] : memref<4x1xf32, #tpu.memory_space<vmem>>, vector<4x1xf32>
    %c0_3 = arith.constant 0 : index
    %c0_4 = arith.constant 0 : index
    %c0_5 = arith.constant 0 : index
    %2 = vector.load %arg2[%c0_3, %c0_4, %c0_5] : memref<2x4x16xf32, #tpu.memory_space<vmem>>, vector<1x4x16xf32>
    %3 = vector.shape_cast %2 : vector<1x4x16xf32> to vector<4x16xf32>
    %cst = arith.constant dense<0.000000e+00> : vector<4x16xf32>
    %4 = tpu.matmul %0, %3, %cst {dimension_numbers = #tpu.dot_dimension_numbers<[1], [0], [0], [1], [0, 0, 1, 1], [], []>} : vector<4x4xf32>, vector<4x16xf32>, vector<4x16xf32> -> vector<4x16xf32>
    %5 = vector.broadcast %1 : vector<4x1xf32> to vector<4x16xf32>
    %6 = arith.addf %4, %5 : vector<4x16xf32>
    %7 = arith.negf %6 : vector<4x16xf32>
    %8 = math.exp %7 : vector<4x16xf32>
    %cst_6 = arith.constant 1.000000e+00 : f32
    %9 = vector.broadcast %cst_6 : f32 to vector<4x16xf32>
    %10 = arith.addf %9, %8 : vector<4x16xf32>
    %11 = arith.divf %9, %10 : vector<4x16xf32>
    %12 = arith.mulf %3, %11 : vector<4x16xf32>
    %c0_7 = arith.constant 0 : index
    %c0_8 = arith.constant 0 : index
    %c0_9 = arith.constant 0 : index
    %13 = vector.load %arg5[%c0_7, %c0_8, %c0_9] : memref<2x4x16xf32, #tpu.memory_space<vmem>>, vector<1x4x16xf32>
    %14 = vector.shape_cast %13 : vector<1x4x16xf32> to vector<4x16xf32>
    %15 = vector.shape_cast %12 : vector<4x16xf32> to vector<1x4x16xf32>
    tpu.vector_store %arg5[%c0_7, %c0_8, %c0_9], %15 {strides = array<i32>} : memref<2x4x16xf32, #tpu.memory_space<vmem>>, vector<1x4x16xf32>,
    %c1 = arith.constant 1 : index
    %c0_10 = arith.constant 0 : index
    %c0_11 = arith.constant 0 : index
    %16 = vector.load %arg2[%c1, %c0_10, %c0_11] : memref<2x4x16xf32, #tpu.memory_space<vmem>>, vector<1x4x16xf32>
    %17 = vector.shape_cast %16 : vector<1x4x16xf32> to vector<4x16xf32>
    %cst_12 = arith.constant dense<0.000000e+00> : vector<4x16xf32>
    %18 = tpu.matmul %0, %17, %cst_12 {dimension_numbers = #tpu.dot_dimension_numbers<[1], [0], [0], [1], [0, 0, 1, 1], [], []>} : vector<4x4xf32>, vector<4x16xf32>, vector<4x16xf32> -> vector<4x16xf32>
    %19 = vector.broadcast %1 : vector<4x1xf32> to vector<4x16xf32>
    %20 = arith.addf %18, %19 : vector<4x16xf32>
    %21 = arith.negf %20 : vector<4x16xf32>
    %22 = math.exp %21 : vector<4x16xf32>
    %cst_13 = arith.constant 1.000000e+00 : f32
    %23 = vector.broadcast %cst_13 : f32 to vector<4x16xf32>
    %24 = arith.addf %23, %22 : vector<4x16xf32>
    %25 = arith.divf %23, %24 : vector<4x16xf32>
    %26 = arith.mulf %17, %25 : vector<4x16xf32>
    %c1_14 = arith.constant 1 : index
    %c0_15 = arith.constant 0 : index
    %c0_16 = arith.constant 0 : index
    %27 = vector.load %arg5[%c1_14, %c0_15, %c0_16] : memref<2x4x16xf32, #tpu.memory_space<vmem>>, vector<1x4x16xf32>
    %28 = vector.shape_cast %27 : vector<1x4x16xf32> to vector<4x16xf32>
    %29 = vector.shape_cast %26 : vector<4x16xf32> to vector<1x4x16xf32>
    tpu.vector_store %arg5[%c1_14, %c0_15, %c0_16], %29 {strides = array<i32>} : memref<2x4x16xf32, #tpu.memory_space<vmem>>, vector<1x4x16xf32>,
    return
  }
  func.func @transform_0(%arg0: i32, %arg1: i32) -> (i32, i32, i32) {
    %c0_i32 = arith.constant 0 : i32
    %c0_i32_0 = arith.constant 0 : i32
    return %arg0, %c0_i32, %arg1 : i32, i32, i32
  }
  func.func @transform_1(%arg0: i32, %arg1: i32) -> (i32, i32) {
    %c0_i32 = arith.constant 0 : i32
    %c0_i32_0 = arith.constant 0 : i32
    %c0_i32_1 = arith.constant 0 : i32
    return %c0_i32, %c0_i32_0 : i32, i32
  }
  func.func @transform_2(%arg0: i32, %arg1: i32) -> (i32, i32) {
    %c0_i32 = arith.constant 0 : i32
    %c0_i32_0 = arith.constant 0 : i32
    %c0_i32_1 = arith.constant 0 : i32
    return %c0_i32, %c0_i32_0 : i32, i32
  }
  func.func @transform_3(%arg0: i32, %arg1: i32) -> (i32, i32, i32) {
    %c0_i32 = arith.constant 0 : i32
    %c0_i32_0 = arith.constant 0 : i32
    return %arg0, %c0_i32, %arg1 : i32, i32, i32
  }
}

module attributes {stable_mosaic.version = 11 : i64} {
  func.func @kernel(%arg0: i32, %arg1: i32, %arg2: memref<2x4x16xf32, #tpu.memory_space<vmem>>, %arg3: memref<4x4xf32, #tpu.memory_space<vmem>>, %arg4: memref<4x1xf32, #tpu.memory_space<vmem>>, %arg5: memref<2x4x16xf32, #tpu.memory_space<vmem>>) attributes {dimension_semantics = [#tpu.dimension_semantics<parallel>, #tpu.dimension_semantics<parallel>], iteration_bounds = array<i64: 1, 1>, scalar_prefetch = 0 : i64, scratch_operands = 0 : i64, tpu.core_type = #tpu.core_type<tc>, window_params = [{transform_indices = @transform_0, window_bounds = array<i64: 2, 4, 16>}, {pipeline_mode = #tpu.pipeline_mode<synchronous>, transform_indices = @transform_1, window_bounds = array<i64: 4, 4>}, {pipeline_mode = #tpu.pipeline_mode<synchronous>, transform_indices = @transform_2, window_bounds = array<i64: 4, 1>}, {transform_indices = @transform_3, window_bounds = array<i64: 2, 4, 16>}]} {
    %c0 = arith.constant 0 : index
    %c0_0 = arith.constant 0 : index
    %0 = vector.load %arg3[%c0, %c0_0] : memref<4x4xf32, #tpu.memory_space<vmem>>, vector<4x4xf32>
    %c0_1 = arith.constant 0 : index
    %c0_2 = arith.constant 0 : index
    %1 = vector.load %arg4[%c0_1, %c0_2] : memref<4x1xf32, #tpu.memory_space<vmem>>, vector<4x1xf32>
    %c0_3 = arith.constant 0 : index
    %c0_4 = arith.constant 0 : index
    %c0_5 = arith.constant 0 : index
    %2 = vector.load %arg2[%c0_3, %c0_4, %c0_5] : memref<2x4x16xf32, #tpu.memory_space<vmem>>, vector<1x4x16xf32>
    %3 = vector.shape_cast %2 : vector<1x4x16xf32> to vector<4x16xf32>
    %cst = arith.constant dense<0.000000e+00> : vector<4x16xf32>
    %4 = tpu.matmul %0, %3, %cst {dimension_numbers = #tpu.dot_dimension_numbers<[1], [0], [0], [1], [0, 0, 1, 1], [], []>} : vector<4x4xf32>, vector<4x16xf32>, vector<4x16xf32> -> vector<4x16xf32>
    %5 = vector.broadcast %1 : vector<4x1xf32> to vector<4x16xf32>
    %6 = arith.addf %4, %5 : vector<4x16xf32>
    %7 = arith.negf %6 : vector<4x16xf32>
    %8 = math.exp %7 : vector<4x16xf32>
    %cst_6 = arith.constant 1.000000e+00 : f32
    %9 = vector.broadcast %cst_6 : f32 to vector<4x16xf32>
    %10 = arith.addf %9, %8 : vector<4x16xf32>
    %11 = arith.divf %9, %10 : vector<4x16xf32>
    %12 = arith.mulf %3, %11 : vector<4x16xf32>
    %c0_7 = arith.constant 0 : index
    %c0_8 = arith.constant 0 : index
    %c0_9 = arith.constant 0 : index
    %13 = vector.load %arg5[%c0_7, %c0_8, %c0_9] : memref<2x4x16xf32, #tpu.memory_space<vmem>>, vector<1x4x16xf32>
    %14 = vector.shape_cast %13 : vector<1x4x16xf32> to vector<4x16xf32>
    %15 = vector.shape_cast %12 : vector<4x16xf32> to vector<1x4x16xf32>
    tpu.vector_store %arg5[%c0_7, %c0_8, %c0_9], %15 {strides = array<i32>} : memref<2x4x16xf32, #tpu.memory_space<vmem>>, vector<1x4x16xf32>,
    %c1 = arith.constant 1 : index
    %c0_10 = arith.constant 0 : index
    %c0_11 = arith.constant 0 : index
    %16 = vector.load %arg2[%c1, %c0_10, %c0_11] : memref<2x4x16xf32, #tpu.memory_space<vmem>>, vector<1x4x16xf32>
    %17 = vector.shape_cast %16 : vector<1x4x16xf32> to vector<4x16xf32>
    %cst_12 = arith.constant dense<0.000000e+00> : vector<4x16xf32>
    %18 = tpu.matmul %0, %17, %cst_12 {dimension_numbers = #tpu.dot_dimension_numbers<[1], [0], [0], [1], [0, 0, 1, 1], [], []>} : vector<4x4xf32>, vector<4x16xf32>, vector<4x16xf32> -> vector<4x16xf32>
    %19 = vector.broadcast %1 : vector<4x1xf32> to vector<4x16xf32>
    %20 = arith.addf %18, %19 : vector<4x16xf32>
    %21 = arith.negf %20 : vector<4x16xf32>
    %22 = math.exp %21 : vector<4x16xf32>
    %cst_13 = arith.constant 1.000000e+00 : f32
    %23 = vector.broadcast %cst_13 : f32 to vector<4x16xf32>
    %24 = arith.addf %23, %22 : vector<4x16xf32>
    %25 = arith.divf %23, %24 : vector<4x16xf32>
    %26 = arith.mulf %17, %25 : vector<4x16xf32>
    %c1_14 = arith.constant 1 : index
    %c0_15 = arith.constant 0 : index
    %c0_16 = arith.constant 0 : index
    %27 = vector.load %arg5[%c1_14, %c0_15, %c0_16] : memref<2x4x16xf32, #tpu.memory_space<vmem>>, vector<1x4x16xf32>
    %28 = vector.shape_cast %27 : vector<1x4x16xf32> to vector<4x16xf32>
    %29 = vector.shape_cast %26 : vector<4x16xf32> to vector<1x4x16xf32>
    tpu.vector_store %arg5[%c1_14, %c0_15, %c0_16], %29 {strides = array<i32>} : memref<2x4x16xf32, #tpu.memory_space<vmem>>, vector<1x4x16xf32>,
    return
  }
  func.func @transform_0(%arg0: i32, %arg1: i32) -> (i32, i32, i32) {
    %c0_i32 = arith.constant 0 : i32
    %c0_i32_0 = arith.constant 0 : i32
    return %arg0, %c0_i32, %arg1 : i32, i32, i32
  }
  func.func @transform_1(%arg0: i32, %arg1: i32) -> (i32, i32) {
    %c0_i32 = arith.constant 0 : i32
    %c0_i32_0 = arith.constant 0 : i32
    %c0_i32_1 = arith.constant 0 : i32
    return %c0_i32, %c0_i32_0 : i32, i32
  }
  func.func @transform_2(%arg0: i32, %arg1: i32) -> (i32, i32) {
    %c0_i32 = arith.constant 0 : i32
    %c0_i32_0 = arith.constant 0 : i32
    %c0_i32_1 = arith.constant 0 : i32
    return %c0_i32, %c0_i32_0 : i32, i32
  }
  func.func @transform_3(%arg0: i32, %arg1: i32) -> (i32, i32, i32) {
    %c0_i32 = arith.constant 0 : i32
    %c0_i32_0 = arith.constant 0 : i32
    return %arg0, %c0_i32, %arg1 : i32, i32, i32
  }
}

</mosaic_0001>

<llo_original>
// kernel: tpu_custom_call.1
$region0: #{tpu_custom_call.1}
  #allocation0 [shape = 'u32[]', space=smem, size = 0x4, offset = 0x4, fixed_abs, tag = 'smem constant byte address 0x4 - core index']
  #allocation1 [shape = 'u32[144,128]{1,0:T(1,128)}', space=vmem, size = 0x12000, scoped, tag = 'internal scratch']
  %s0 = inlined_call_operand.hbm [shape: f32[2,4,16], index: 0, kind: input, shape index: {}]
  %s1 = inlined_call_operand.vmem [shape: f32[4,4], index: 1, kind: input, shape index: {}]
  %s2 = inlined_call_operand.vmem [shape: f32[4,1], index: 2, kind: input, shape index: {}]
  %s3 = inlined_call_operand.hbm [shape: f32[2,4,16], index: 3, kind: output, shape index: {}]
  %s4 = sld [smem:[#allocation0]]
  $region26: #{tpu_custom_call.1} parent=0
    _
  %s6 = ssub.s32 1, %s4
  %s7 = scalar_select 0, %s6, %s4
  $region1: #{tpu_custom_call.1} parent=0
    #allocation2 [shape = 'u8[4096]{0}', space=vmem, size = 0x1000, scoped, tag = 'input window, operand 0, single buffered']
    #allocation3 [shape = 's32[1]{0}', space=sflag, size = 0x4, scoped, tag = 'scoped memory for tpu_custom_call.1']
    #allocation4 [shape = 's32[1]{0}', space=sflag, size = 0x4, scoped, tag = 'scoped memory for tpu_custom_call.1']
    #allocation5 [shape = 'u8[4096]{0}', space=vmem, size = 0x1000, scoped, tag = 'output window, operand 0, single buffered']
    %8 = vsyncpa [#allocation3], 0
    %9 = vsyncpa [#allocation4], 0
    // Predicated region
    $region2: #{tpu_custom_call.1} parent=1 // pred_check
      _
    $region3: #{tpu_custom_call.1} parent=1 // pred_check_branch
      %11 = sbr.rel (0) target = $region5
    $region4: #{tpu_custom_call.1} parent=1 // pred_region
      %s13 = ssub.s32 128, 128
      %14 = vsyncadd [#allocation3], %s13
      %s15 = sshll.u32 [#allocation2], 4
      %s16 = int_to_ptr.vmem [resolvable:$true] %s15
      %21 = dma.hbm_to_vmem [thread:$0]  %s0, 128, %s16, [#allocation3], 64, 64, 4
    $region5: #{tpu_custom_call.1} parent=1 // pred_fallthru
      _
    // Predicated region
    $region6: #{tpu_custom_call.1} parent=1 // pred_check
      _
    $region7: #{tpu_custom_call.1} parent=1 // pred_check_branch
      %23 = sbr.rel (0) target = $region9
    $region8: #{tpu_custom_call.1} parent=1 // pred_region
      _
    $region9: #{tpu_custom_call.1} parent=1 // pred_fallthru
      _
    // Predicated region
    $region10: #{tpu_custom_call.1} parent=1 // pred_check
      _
    $region11: #{tpu_custom_call.1} parent=1 // pred_check_branch
      %25 = sbr.rel (0) target = $region13
    $region12: #{tpu_custom_call.1} parent=1 // pred_region
      _
    $region13: #{tpu_custom_call.1} parent=1 // pred_fallthru
      _
    // Predicated region
    $region14: #{tpu_custom_call.1} parent=1 // pred_check
      _
    $region15: #{tpu_custom_call.1} parent=1 // pred_check_branch
      %27 = sbr.rel (0) target = $region17
    $region16: #{tpu_custom_call.1} parent=1 // pred_region
      %28 = dma.done [#allocation3], 128
    $region17: #{tpu_custom_call.1} parent=1 // pred_fallthru
      _
    %v29 = vld [vmem:[%s1] sm:$0xf]
    %v30 = vld [vmem:[%s2] sm:$0xf]
    %v31 = vld [vmem:[#allocation2] sm:$0xf]
    %33 = vset.pattern.permute.xlu0 0
    %34 = vperm.xlu0 %33, %v30
    %v35 = vpop.permute.xlu0 %34
    %vm37 = vcmask 31744
    %v39 = vsel %vm37, %v29, 0
    %vm41 = vcmask 1043456
    %v43 = vsel %vm41, %v31, 0
    %45 = vmatprep.subr.mxu0 0.0
    %46 = vmatpush1.msra.mxu0 0.0
    %47 = vmatprep.subr.mxu0 0.0
    %48 = vmatpush1.msra.mxu0 0.0
    %49 = vmatprep.subr.mxu0 0.0
    %50 = vmatpush1.msra.mxu0 0.0
    %51 = vmatprep.subr.mxu0 0.0
    %52 = vmatpush1.msra.mxu0 0.0
    %53 = vmatprep.subr.mxu0 0.0
    %54 = vmatpush1.msra.mxu0 0.0
    %55 = vmatprep.subr.mxu0 0.0
    %56 = vmatpush1.msra.mxu0 0.0
    %57 = vmatprep.subr.mxu0 0.0
    %58 = vmatpush1.msra.mxu0 0.0
    %59 = vmatprep.subr.mxu0 0.0
    %60 = vmatpush1.msra.mxu0 0.0
    %61 = vmatprep.subr.mxu0 0.0
    %62 = vmatpush1.msra.mxu0 0.0
    %63 = vmatprep.subr.mxu0 0.0
    %64 = vmatpush1.msra.mxu0 0.0
    %65 = vmatprep.subr.mxu0 0.0
    %66 = vmatpush1.msra.mxu0 0.0
    %67 = vmatprep.subr.mxu0 0.0
    %68 = vmatpush1.msra.mxu0 0.0
    %69 = vmatprep.subr.mxu0 0.0
    %70 = vmatpush1.msra.mxu0 0.0
    %71 = vmatprep.subr.mxu0 0.0
    %72 = vmatpush1.msra.mxu0 0.0
    %73 = vmatprep.subr.mxu0 0.0
    %74 = vmatpush1.msra.mxu0 0.0
    %75 = vmatprep.subr.mxu0 0.0
    %76 = vmatpush1.msra.mxu0 %v43
    %77 = vmatprep.subr.mxu0 0.0
    %78 = vmatpush2.msra.mxu0 0.0
    %79 = vmatprep.subr.mxu0 0.0
    %80 = vmatpush2.msra.mxu0 0.0
    %81 = vmatprep.subr.mxu0 0.0
    %82 = vmatpush2.msra.mxu0 0.0
    %83 = vmatprep.subr.mxu0 0.0
    %84 = vmatpush2.msra.mxu0 0.0
    %85 = vmatprep.subr.mxu0 0.0
    %86 = vmatpush2.msra.mxu0 0.0
    %87 = vmatprep.subr.mxu0 0.0
    %88 = vmatpush2.msra.mxu0 0.0
    %89 = vmatprep.subr.mxu0 0.0
    %90 = vmatpush2.msra.mxu0 0.0
    %91 = vmatprep.subr.mxu0 0.0
    %92 = vmatpush2.msra.mxu0 0.0
    %93 = vmatprep.subr.mxu0 0.0
    %94 = vmatpush2.msra.mxu0 0.0
    %95 = vmatprep.subr.mxu0 0.0
    %96 = vmatpush2.msra.mxu0 0.0
    %97 = vmatprep.subr.mxu0 0.0
    %98 = vmatpush2.msra.mxu0 0.0
    %99 = vmatprep.subr.mxu0 0.0
    %100 = vmatpush2.msra.mxu0 0.0
    %101 = vmatprep.subr.mxu0 0.0
    %102 = vmatpush2.msra.mxu0 0.0
    %103 = vmatprep.subr.mxu0 0.0
    %104 = vmatpush2.msra.mxu0 0.0
    %105 = vmatprep.subr.mxu0 0.0
    %106 = vmatpush2.msra.mxu0 0.0
    %107 = vmatprep.subr.mxu0 0.0
    %108 = vmatpush2.msra.mxu0 0.0
    %109 = vmatprep.mubr.f32.mxu0 0.0
    %110 = vmatmul.mubr.f32.gmra.mxu0 %v39
    %v111 = vpop.f32.mrf.mxu0
    %v112 = vadd.f32 %v35, %v111
    %v113 = vpop.f32.mrf.mxu0
    %114 = vdwg.mxu0
    %v115 = vxor.u32 %v112, 2147483648
    %v116 = vmul.f32 %v115, 1.442695
    %v117 = vpow.pop %v116
    %v118 = vadd.f32 %v117, 1.0
    %v119 = vrcp.pop %v118
    %v120 = vmul.f32 1.0, %v119
    %v121 = vmul.f32 %v31, %v120
    %vm122 = vcmask 125952
    %123 = vst.msk [vmem:[#allocation5] sm:$0xf] %vm122, %v121
    %s124 = scalar_lea.vmem [#allocation2], 4
    %v125 = vld [vmem:[%s124] sm:$0xf]
    %v127 = vsel %vm41, %v125, 0
    %129 = vmatprep.subr.mxu0 0.0
    %130 = vmatpush1.msra.mxu0 0.0
    %131 = vmatprep.subr.mxu0 0.0
    %132 = vmatpush1.msra.mxu0 0.0
    %133 = vmatprep.subr.mxu0 0.0
    %134 = vmatpush1.msra.mxu0 0.0
    %135 = vmatprep.subr.mxu0 0.0
    %136 = vmatpush1.msra.mxu0 0.0
    %137 = vmatprep.subr.mxu0 0.0
    %138 = vmatpush1.msra.mxu0 0.0
    %139 = vmatprep.subr.mxu0 0.0
    %140 = vmatpush1.msra.mxu0 0.0
    %141 = vmatprep.subr.mxu0 0.0
    %142 = vmatpush1.msra.mxu0 0.0
    %143 = vmatprep.subr.mxu0 0.0
    %144 = vmatpush1.msra.mxu0 0.0
    %145 = vmatprep.subr.mxu0 0.0
    %146 = vmatpush1.msra.mxu0 0.0
    %147 = vmatprep.subr.mxu0 0.0
    %148 = vmatpush1.msra.mxu0 0.0
    %149 = vmatprep.subr.mxu0 0.0
    %150 = vmatpush1.msra.mxu0 0.0
    %151 = vmatprep.subr.mxu0 0.0
    %152 = vmatpush1.msra.mxu0 0.0
    %153 = vmatprep.subr.mxu0 0.0
    %154 = vmatpush1.msra.mxu0 0.0
    %155 = vmatprep.subr.mxu0 0.0
    %156 = vmatpush1.msra.mxu0 0.0
    %157 = vmatprep.subr.mxu0 0.0
    %158 = vmatpush1.msra.mxu0 0.0
    %159 = vmatprep.subr.mxu0 0.0
    %160 = vmatpush1.msra.mxu0 %v127
    %161 = vmatprep.subr.mxu0 0.0
    %162 = vmatpush2.msra.mxu0 0.0
    %163 = vmatprep.subr.mxu0 0.0
    %164 = vmatpush2.msra.mxu0 0.0
    %165 = vmatprep.subr.mxu0 0.0
    %166 = vmatpush2.msra.mxu0 0.0
    %167 = vmatprep.subr.mxu0 0.0
    %168 = vmatpush2.msra.mxu0 0.0
    %169 = vmatprep.subr.mxu0 0.0
    %170 = vmatpush2.msra.mxu0 0.0
    %171 = vmatprep.subr.mxu0 0.0
    %172 = vmatpush2.msra.mxu0 0.0
    %173 = vmatprep.subr.mxu0 0.0
    %174 = vmatpush2.msra.mxu0 0.0
    %175 = vmatprep.subr.mxu0 0.0
    %176 = vmatpush2.msra.mxu0 0.0
    %177 = vmatprep.subr.mxu0 0.0
    %178 = vmatpush2.msra.mxu0 0.0
    %179 = vmatprep.subr.mxu0 0.0
    %180 = vmatpush2.msra.mxu0 0.0
    %181 = vmatprep.subr.mxu0 0.0
    %182 = vmatpush2.msra.mxu0 0.0
    %183 = vmatprep.subr.mxu0 0.0
    %184 = vmatpush2.msra.mxu0 0.0
    %185 = vmatprep.subr.mxu0 0.0
    %186 = vmatpush2.msra.mxu0 0.0
    %187 = vmatprep.subr.mxu0 0.0
    %188 = vmatpush2.msra.mxu0 0.0
    %189 = vmatprep.subr.mxu0 0.0
    %190 = vmatpush2.msra.mxu0 0.0
    %191 = vmatprep.subr.mxu0 0.0
    %192 = vmatpush2.msra.mxu0 0.0
    %193 = vmatprep.mubr.f32.mxu0 0.0
    %194 = vmatmul.mubr.f32.gmra.mxu0 %v39
    %v195 = vpop.f32.mrf.mxu0
    %v196 = vadd.f32 %v35, %v195
    %v197 = vpop.f32.mrf.mxu0
    %198 = vdwg.mxu0
    %v199 = vxor.u32 %v196, 2147483648
    %v200 = vmul.f32 %v199, 1.442695
    %v201 = vpow.pop %v200
    %v202 = vadd.f32 %v201, 1.0
    %v203 = vrcp.pop %v202
    %v204 = vmul.f32 1.0, %v203
    %v205 = vmul.f32 %v125, %v204
    %s206 = scalar_lea.vmem [#allocation5], 4
    %207 = vst.msk [vmem:[%s206] sm:$0xf] %vm122, %v205
    // Predicated region
    $region18: #{tpu_custom_call.1} parent=1 // pred_check
      _
    $region19: #{tpu_custom_call.1} parent=1 // pred_check_branch
      %209 = sbr.rel (0) target = $region21
    $region20: #{tpu_custom_call.1} parent=1 // pred_region
      %s211 = ssub.s32 128, 128
      %212 = vsyncadd [#allocation4], %s211
      %s213 = sshll.u32 [#allocation5], 4
      %s214 = int_to_ptr.vmem [resolvable:$true] %s213
      %219 = dma.vmem_to_hbm [thread:$0]  %s214, 128, %s3, [#allocation4], 64, 64, 4
    $region21: #{tpu_custom_call.1} parent=1 // pred_fallthru
      _
    // Predicated region
    $region22: #{tpu_custom_call.1} parent=1 // pred_check
      _
    $region23: #{tpu_custom_call.1} parent=1 // pred_check_branch
      %221 = sbr.rel (0) target = $region25
    $region24: #{tpu_custom_call.1} parent=1 // pred_region
      %222 = dma.done [#allocation4], 128
    $region25: #{tpu_custom_call.1} parent=1 // pred_fallthru
      _
    %223 = vsyncpa [#allocation3], 1
    %224 = vsyncpa [#allocation4], 1

// kernel: tpu_custom_call.1
$region0: #{tpu_custom_call.1}
  #allocation0 [shape = 'u32[]', space=smem, size = 0x4, offset = 0x4, fixed_abs, tag = 'smem constant byte address 0x4 - core index']
  #allocation1 [shape = 'u32[144,128]{1,0:T(1,128)}', space=vmem, size = 0x12000, scoped, tag = 'internal scratch']
  %s0 = inlined_call_operand.hbm [shape: f32[2,4,16], index: 0, kind: input, shape index: {}]
  %s1 = inlined_call_operand.vmem [shape: f32[4,4], index: 1, kind: input, shape index: {}]
  %s2 = inlined_call_operand.vmem [shape: f32[4,1], index: 2, kind: input, shape index: {}]
  %s3 = inlined_call_operand.hbm [shape: f32[2,4,16], index: 3, kind: output, shape index: {}]
  %s4 = sld [smem:[#allocation0]]
  $region26: #{tpu_custom_call.1} parent=0
    _
  %s6 = ssub.s32 1, %s4
  %s7 = scalar_select 0, %s6, %s4
  $region1: #{tpu_custom_call.1} parent=0
    #allocation2 [shape = 'u8[4096]{0}', space=vmem, size = 0x1000, scoped, tag = 'input window, operand 0, single buffered']
    #allocation3 [shape = 's32[1]{0}', space=sflag, size = 0x4, scoped, tag = 'scoped memory for tpu_custom_call.1']
    #allocation4 [shape = 's32[1]{0}', space=sflag, size = 0x4, scoped, tag = 'scoped memory for tpu_custom_call.1']
    #allocation5 [shape = 'u8[4096]{0}', space=vmem, size = 0x1000, scoped, tag = 'output window, operand 0, single buffered']
    %8 = vsyncpa [#allocation3], 0
    %9 = vsyncpa [#allocation4], 0
    // Predicated region
    $region2: #{tpu_custom_call.1} parent=1 // pred_check
      _
    $region3: #{tpu_custom_call.1} parent=1 // pred_check_branch
      %11 = sbr.rel (0) target = $region5
    $region4: #{tpu_custom_call.1} parent=1 // pred_region
      %s13 = ssub.s32 128, 128
      %14 = vsyncadd [#allocation3], %s13
      %s15 = sshll.u32 [#allocation2], 4
      %s16 = int_to_ptr.vmem [resolvable:$true] %s15
      %21 = dma.hbm_to_vmem [thread:$0]  %s0, 128, %s16, [#allocation3], 64, 64, 4
    $region5: #{tpu_custom_call.1} parent=1 // pred_fallthru
      _
    // Predicated region
    $region6: #{tpu_custom_call.1} parent=1 // pred_check
      _
    $region7: #{tpu_custom_call.1} parent=1 // pred_check_branch
      %23 = sbr.rel (0) target = $region9
    $region8: #{tpu_custom_call.1} parent=1 // pred_region
      _
    $region9: #{tpu_custom_call.1} parent=1 // pred_fallthru
      _
    // Predicated region
    $region10: #{tpu_custom_call.1} parent=1 // pred_check
      _
    $region11: #{tpu_custom_call.1} parent=1 // pred_check_branch
      %25 = sbr.rel (0) target = $region13
    $region12: #{tpu_custom_call.1} parent=1 // pred_region
      _
    $region13: #{tpu_custom_call.1} parent=1 // pred_fallthru
      _
    // Predicated region
    $region14: #{tpu_custom_call.1} parent=1 // pred_check
      _
    $region15: #{tpu_custom_call.1} parent=1 // pred_check_branch
      %27 = sbr.rel (0) target = $region17
    $region16: #{tpu_custom_call.1} parent=1 // pred_region
      %28 = dma.done [#allocation3], 128
    $region17: #{tpu_custom_call.1} parent=1 // pred_fallthru
      _
    %v29 = vld [vmem:[%s1] sm:$0xf]
    %v30 = vld [vmem:[%s2] sm:$0xf]
    %v31 = vld [vmem:[#allocation2] sm:$0xf]
    %33 = vset.pattern.permute.xlu0 0
    %34 = vperm.xlu0 %33, %v30
    %v35 = vpop.permute.xlu0 %34
    %vm37 = vcmask 31744
    %v39 = vsel %vm37, %v29, 0
    %vm41 = vcmask 1043456
    %v43 = vsel %vm41, %v31, 0
    %45 = vmatprep.subr.mxu0 0.0
    %46 = vmatpush1.msra.mxu0 0.0
    %47 = vmatprep.subr.mxu0 0.0
    %48 = vmatpush1.msra.mxu0 0.0
    %49 = vmatprep.subr.mxu0 0.0
    %50 = vmatpush1.msra.mxu0 0.0
    %51 = vmatprep.subr.mxu0 0.0
    %52 = vmatpush1.msra.mxu0 0.0
    %53 = vmatprep.subr.mxu0 0.0
    %54 = vmatpush1.msra.mxu0 0.0
    %55 = vmatprep.subr.mxu0 0.0
    %56 = vmatpush1.msra.mxu0 0.0
    %57 = vmatprep.subr.mxu0 0.0
    %58 = vmatpush1.msra.mxu0 0.0
    %59 = vmatprep.subr.mxu0 0.0
    %60 = vmatpush1.msra.mxu0 0.0
    %61 = vmatprep.subr.mxu0 0.0
    %62 = vmatpush1.msra.mxu0 0.0
    %63 = vmatprep.subr.mxu0 0.0
    %64 = vmatpush1.msra.mxu0 0.0
    %65 = vmatprep.subr.mxu0 0.0
    %66 = vmatpush1.msra.mxu0 0.0
    %67 = vmatprep.subr.mxu0 0.0
    %68 = vmatpush1.msra.mxu0 0.0
    %69 = vmatprep.subr.mxu0 0.0
    %70 = vmatpush1.msra.mxu0 0.0
    %71 = vmatprep.subr.mxu0 0.0
    %72 = vmatpush1.msra.mxu0 0.0
    %73 = vmatprep.subr.mxu0 0.0
    %74 = vmatpush1.msra.mxu0 0.0
    %75 = vmatprep.subr.mxu0 0.0
    %76 = vmatpush1.msra.mxu0 %v43
    %77 = vmatprep.subr.mxu0 0.0
    %78 = vmatpush2.msra.mxu0 0.0
    %79 = vmatprep.subr.mxu0 0.0
    %80 = vmatpush2.msra.mxu0 0.0
    %81 = vmatprep.subr.mxu0 0.0
    %82 = vmatpush2.msra.mxu0 0.0
    %83 = vmatprep.subr.mxu0 0.0
    %84 = vmatpush2.msra.mxu0 0.0
    %85 = vmatprep.subr.mxu0 0.0
    %86 = vmatpush2.msra.mxu0 0.0
    %87 = vmatprep.subr.mxu0 0.0
    %88 = vmatpush2.msra.mxu0 0.0
    %89 = vmatprep.subr.mxu0 0.0
    %90 = vmatpush2.msra.mxu0 0.0
    %91 = vmatprep.subr.mxu0 0.0
    %92 = vmatpush2.msra.mxu0 0.0
    %93 = vmatprep.subr.mxu0 0.0
    %94 = vmatpush2.msra.mxu0 0.0
    %95 = vmatprep.subr.mxu0 0.0
    %96 = vmatpush2.msra.mxu0 0.0
    %97 = vmatprep.subr.mxu0 0.0
    %98 = vmatpush2.msra.mxu0 0.0
    %99 = vmatprep.subr.mxu0 0.0
    %100 = vmatpush2.msra.mxu0 0.0
    %101 = vmatprep.subr.mxu0 0.0
    %102 = vmatpush2.msra.mxu0 0.0
    %103 = vmatprep.subr.mxu0 0.0
    %104 = vmatpush2.msra.mxu0 0.0
    %105 = vmatprep.subr.mxu0 0.0
    %106 = vmatpush2.msra.mxu0 0.0
    %107 = vmatprep.subr.mxu0 0.0
    %108 = vmatpush2.msra.mxu0 0.0
    %109 = vmatprep.mubr.f32.mxu0 0.0
    %110 = vmatmul.mubr.f32.gmra.mxu0 %v39
    %v111 = vpop.f32.mrf.mxu0
    %v112 = vadd.f32 %v35, %v111
    %v113 = vpop.f32.mrf.mxu0
    %114 = vdwg.mxu0
    %v115 = vxor.u32 %v112, 2147483648
    %v116 = vmul.f32 %v115, 1.442695
    %v117 = vpow.pop %v116
    %v118 = vadd.f32 %v117, 1.0
    %v119 = vrcp.pop %v118
    %v120 = vmul.f32 1.0, %v119
    %v121 = vmul.f32 %v31, %v120
    %vm122 = vcmask 125952
    %123 = vst.msk [vmem:[#allocation5] sm:$0xf] %vm122, %v121
    %s124 = scalar_lea.vmem [#allocation2], 4
    %v125 = vld [vmem:[%s124] sm:$0xf]
    %v127 = vsel %vm41, %v125, 0
    %129 = vmatprep.subr.mxu0 0.0
    %130 = vmatpush1.msra.mxu0 0.0
    %131 = vmatprep.subr.mxu0 0.0
    %132 = vmatpush1.msra.mxu0 0.0
    %133 = vmatprep.subr.mxu0 0.0
    %134 = vmatpush1.msra.mxu0 0.0
    %135 = vmatprep.subr.mxu0 0.0
    %136 = vmatpush1.msra.mxu0 0.0
    %137 = vmatprep.subr.mxu0 0.0
    %138 = vmatpush1.msra.mxu0 0.0
    %139 = vmatprep.subr.mxu0 0.0
    %140 = vmatpush1.msra.mxu0 0.0
    %141 = vmatprep.subr.mxu0 0.0
    %142 = vmatpush1.msra.mxu0 0.0
    %143 = vmatprep.subr.mxu0 0.0
    %144 = vmatpush1.msra.mxu0 0.0
    %145 = vmatprep.subr.mxu0 0.0
    %146 = vmatpush1.msra.mxu0 0.0
    %147 = vmatprep.subr.mxu0 0.0
    %148 = vmatpush1.msra.mxu0 0.0
    %149 = vmatprep.subr.mxu0 0.0
    %150 = vmatpush1.msra.mxu0 0.0
    %151 = vmatprep.subr.mxu0 0.0
    %152 = vmatpush1.msra.mxu0 0.0
    %153 = vmatprep.subr.mxu0 0.0
    %154 = vmatpush1.msra.mxu0 0.0
    %155 = vmatprep.subr.mxu0 0.0
    %156 = vmatpush1.msra.mxu0 0.0
    %157 = vmatprep.subr.mxu0 0.0
    %158 = vmatpush1.msra.mxu0 0.0
    %159 = vmatprep.subr.mxu0 0.0
    %160 = vmatpush1.msra.mxu0 %v127
    %161 = vmatprep.subr.mxu0 0.0
    %162 = vmatpush2.msra.mxu0 0.0
    %163 = vmatprep.subr.mxu0 0.0
    %164 = vmatpush2.msra.mxu0 0.0
    %165 = vmatprep.subr.mxu0 0.0
    %166 = vmatpush2.msra.mxu0 0.0
    %167 = vmatprep.subr.mxu0 0.0
    %168 = vmatpush2.msra.mxu0 0.0
    %169 = vmatprep.subr.mxu0 0.0
    %170 = vmatpush2.msra.mxu0 0.0
    %171 = vmatprep.subr.mxu0 0.0
    %172 = vmatpush2.msra.mxu0 0.0
    %173 = vmatprep.subr.mxu0 0.0
    %174 = vmatpush2.msra.mxu0 0.0
    %175 = vmatprep.subr.mxu0 0.0
    %176 = vmatpush2.msra.mxu0 0.0
    %177 = vmatprep.subr.mxu0 0.0
    %178 = vmatpush2.msra.mxu0 0.0
    %179 = vmatprep.subr.mxu0 0.0
    %180 = vmatpush2.msra.mxu0 0.0
    %181 = vmatprep.subr.mxu0 0.0
    %182 = vmatpush2.msra.mxu0 0.0
    %183 = vmatprep.subr.mxu0 0.0
    %184 = vmatpush2.msra.mxu0 0.0
    %185 = vmatprep.subr.mxu0 0.0
    %186 = vmatpush2.msra.mxu0 0.0
    %187 = vmatprep.subr.mxu0 0.0
    %188 = vmatpush2.msra.mxu0 0.0
    %189 = vmatprep.subr.mxu0 0.0
    %190 = vmatpush2.msra.mxu0 0.0
    %191 = vmatprep.subr.mxu0 0.0
    %192 = vmatpush2.msra.mxu0 0.0
    %193 = vmatprep.mubr.f32.mxu0 0.0
    %194 = vmatmul.mubr.f32.gmra.mxu0 %v39
    %v195 = vpop.f32.mrf.mxu0
    %v196 = vadd.f32 %v35, %v195
    %v197 = vpop.f32.mrf.mxu0
    %198 = vdwg.mxu0
    %v199 = vxor.u32 %v196, 2147483648
    %v200 = vmul.f32 %v199, 1.442695
    %v201 = vpow.pop %v200
    %v202 = vadd.f32 %v201, 1.0
    %v203 = vrcp.pop %v202
    %v204 = vmul.f32 1.0, %v203
    %v205 = vmul.f32 %v125, %v204
    %s206 = scalar_lea.vmem [#allocation5], 4
    %207 = vst.msk [vmem:[%s206] sm:$0xf] %vm122, %v205
    // Predicated region
    $region18: #{tpu_custom_call.1} parent=1 // pred_check
      _
    $region19: #{tpu_custom_call.1} parent=1 // pred_check_branch
      %209 = sbr.rel (0) target = $region21
    $region20: #{tpu_custom_call.1} parent=1 // pred_region
      %s211 = ssub.s32 128, 128
      %212 = vsyncadd [#allocation4], %s211
      %s213 = sshll.u32 [#allocation5], 4
      %s214 = int_to_ptr.vmem [resolvable:$true] %s213
      %219 = dma.vmem_to_hbm [thread:$0]  %s214, 128, %s3, [#allocation4], 64, 64, 4
    $region21: #{tpu_custom_call.1} parent=1 // pred_fallthru
      _
    // Predicated region
    $region22: #{tpu_custom_call.1} parent=1 // pred_check
      _
    $region23: #{tpu_custom_call.1} parent=1 // pred_check_branch
      %221 = sbr.rel (0) target = $region25
    $region24: #{tpu_custom_call.1} parent=1 // pred_region
      %222 = dma.done [#allocation4], 128
    $region25: #{tpu_custom_call.1} parent=1 // pred_fallthru
      _
    %223 = vsyncpa [#allocation3], 1
    %224 = vsyncpa [#allocation4], 1

</llo_original>
